<compile_context>
chip_gen: v7x
topology: tpu7x:2x2x1
jax: 0.10.0
libtpu: 0.0.40
codegen_flags: <defaults>
</compile_context>

<pallas_src>
import jax
import jax.numpy as jnp
from jax.experimental import pallas as pl
from jax.experimental.pallas import tpu as pltpu


def _fc_kernel(x_ref, w_ref, b_ref, o_ref):
    # x_ref: (TILE_B, K)   w_ref: (K, M*3)   b_ref: (1, M*3)   o_ref: (TILE_B, M*3)
    y = jnp.dot(x_ref[...], w_ref[...], preferred_element_type=jnp.float32)
    o_ref[...] = (y + b_ref[...]).astype(o_ref.dtype)


def _pick_row_tile(num_rows: int, k: int) -> int:
    """Row tile: <= ~4 MiB for the double-buffered x tile, <=1024 rows."""
    bytes_per_row = k * 4
    cap_rows = max(8, (4 * 1024 * 1024) // (2 * bytes_per_row))
    tile = min(1024, cap_rows, num_rows)
    if tile < num_rows:
        # Interior tiles must satisfy the (8, 128) sublane rule.
        tile = max(8, (tile // 8) * 8)
    # If tile == num_rows the block equals the full array dim (always legal).
    return tile


def translation_from_embedding_separate(X, weight, bias):
    """Functional equivalent of TranslationFromEmbeddingSeparate.forward.

    X:      dict with 'part_shape_features' of shape (B, M, D)
    weight: (M*3, M*D)  -- torch nn.Linear layout (out_features, in_features)
    bias:   (M*3,)
    Returns a new dict that also contains 'translations' of shape (B, M, 3).
    """
    feats = X["part_shape_features"]
    B, M, D = feats.shape
    K = M * D
    n_out = M * 3

    x2d = feats.reshape(B, K)
    w_kn = weight.T.reshape(K, n_out)      # (K, M*3) so the kernel does x @ W
    b2d = bias.reshape(1, n_out)

    tile_b = _pick_row_tile(B, K)
    grid = (pl.cdiv(B, tile_b),)

    cost = pl.CostEstimate(
        flops=2 * B * K * n_out,
        transcendentals=0,
        bytes_accessed=4 * (B * K + K * n_out + n_out + B * n_out),
    )

    out2d = pl.pallas_call(
        _fc_kernel,
        out_shape=jax.ShapeDtypeStruct((B, n_out), feats.dtype),
        grid=grid,
        in_specs=[
            pl.BlockSpec((tile_b, K), lambda i: (i, 0)),   # streamed activations
            pl.BlockSpec((K, n_out), lambda i: (0, 0)),    # resident weight
            pl.BlockSpec((1, n_out), lambda i: (0, 0)),    # resident bias
        ],
        out_specs=pl.BlockSpec((tile_b, n_out), lambda i: (i, 0)),
        compiler_params=pltpu.CompilerParams(
            dimension_semantics=("parallel",),
        ),
        cost_estimate=cost,
    )(x2d, w_kn, b2d)

    out_dict = dict(X)
    out_dict["translations"] = out2d.reshape(B, M, 3)
    return out_dict


if __name__ == "__main__":
    key = jax.random.PRNGKey(0)
    k_feat, k_w, k_b = jax.random.split(key, 3)

    # Small shapes consistent with the module: batch=2, num_parts=8, in_dims=32
    B, num_parts, in_dims = 2, 8, 32
    M, D = num_parts, in_dims

    part_shape_features = jax.random.normal(k_feat, (B, M, D), dtype=jnp.float32)

    # torch.nn.Linear default weight init: U(-1/sqrt(fan_in), 1/sqrt(fan_in)),
    # fan_in = num_parts * in_dims.  Weight kept in torch (out, in) layout.
    fan_in = M * D
    bound = 1.0 / (fan_in ** 0.5)
    weight = jax.random.uniform(
        k_w, (M * 3, M * D), minval=-bound, maxval=bound, dtype=jnp.float32
    )
    # Module-specific bias init: (rand(num_parts, 3) - 0.5).reshape(num_parts*3)
    bias = (
        jax.random.uniform(k_b, (M, 3), dtype=jnp.float32) - 0.5
    ).reshape(M * 3)

    X = {"part_shape_features": part_shape_features}
    result = translation_from_embedding_separate(X, weight, bias)
    translations = jax.block_until_ready(result["translations"])

    # Reference check in plain JAX (same math as the torch module).
    ref = (part_shape_features.reshape(B, M * D) @ weight.T + bias).reshape(B, M, 3)
    assert translations.shape == (B, M, 3)
    assert jnp.allclose(translations, ref, atol=1e-5, rtol=1e-5)

    print("KERNEL_OK")
</pallas_src>

<mosaic_0001>
module attributes {stable_mosaic.version = 11 : i64} {
  func.func @_fc_kernel(%arg0: i32, %arg1: memref<2x256xf32, #tpu.memory_space<vmem>>, %arg2: memref<256x24xf32, #tpu.memory_space<vmem>>, %arg3: memref<1x24xf32, #tpu.memory_space<vmem>>, %arg4: memref<2x24xf32, #tpu.memory_space<vmem>>) attributes {dimension_semantics = [#tpu.dimension_semantics<parallel>], iteration_bounds = array<i64: 1>, scalar_prefetch = 0 : i64, scratch_operands = 0 : i64, tpu.core_type = #tpu.core_type<tc>, window_params = [{transform_indices = @transform_0, window_bounds = array<i64: 2, 256>}, {pipeline_mode = #tpu.pipeline_mode<synchronous>, transform_indices = @transform_1, window_bounds = array<i64: 256, 24>}, {pipeline_mode = #tpu.pipeline_mode<synchronous>, transform_indices = @transform_2, window_bounds = array<i64: 1, 24>}, {transform_indices = @transform_3, window_bounds = array<i64: 2, 24>}]} {
    %c0 = arith.constant 0 : index
    %c0_0 = arith.constant 0 : index
    %0 = vector.load %arg1[%c0, %c0_0] : memref<2x256xf32, #tpu.memory_space<vmem>>, vector<2x256xf32>
    %c0_1 = arith.constant 0 : index
    %c0_2 = arith.constant 0 : index
    %1 = vector.load %arg2[%c0_1, %c0_2] : memref<256x24xf32, #tpu.memory_space<vmem>>, vector<256x24xf32>
    %cst = arith.constant dense<0.000000e+00> : vector<2x24xf32>
    %2 = tpu.matmul %0, %1, %cst {dimension_numbers = #tpu.dot_dimension_numbers<[1], [0], [0], [1], [0, 0, 1, 1], [], []>} : vector<2x256xf32>, vector<256x24xf32>, vector<2x24xf32> -> vector<2x24xf32>
    %c0_3 = arith.constant 0 : index
    %c0_4 = arith.constant 0 : index
    %3 = vector.load %arg3[%c0_3, %c0_4] : memref<1x24xf32, #tpu.memory_space<vmem>>, vector<1x24xf32>
    %4 = vector.broadcast %3 : vector<1x24xf32> to vector<2x24xf32>
    %5 = arith.addf %2, %4 : vector<2x24xf32>
    %c0_5 = arith.constant 0 : index
    %c0_6 = arith.constant 0 : index
    %6 = vector.load %arg4[%c0_5, %c0_6] : memref<2x24xf32, #tpu.memory_space<vmem>>, vector<2x24xf32>
    tpu.vector_store %arg4[%c0_5, %c0_6], %5 {strides = array<i32>} : memref<2x24xf32, #tpu.memory_space<vmem>>, vector<2x24xf32>,
    return
  }
  func.func @transform_0(%arg0: i32) -> (i32, i32) {
    %c0_i32 = arith.constant 0 : i32
    %c0_i32_0 = arith.constant 0 : i32
    return %arg0, %c0_i32 : i32, i32
  }
  func.func @transform_1(%arg0: i32) -> (i32, i32) {
    %c0_i32 = arith.constant 0 : i32
    %c0_i32_0 = arith.constant 0 : i32
    %c0_i32_1 = arith.constant 0 : i32
    return %c0_i32, %c0_i32_0 : i32, i32
  }
  func.func @transform_2(%arg0: i32) -> (i32, i32) {
    %c0_i32 = arith.constant 0 : i32
    %c0_i32_0 = arith.constant 0 : i32
    %c0_i32_1 = arith.constant 0 : i32
    return %c0_i32, %c0_i32_0 : i32, i32
  }
  func.func @transform_3(%arg0: i32) -> (i32, i32) {
    %c0_i32 = arith.constant 0 : i32
    %c0_i32_0 = arith.constant 0 : i32
    return %arg0, %c0_i32 : i32, i32
  }
}

</mosaic_0001>

<llo_original>
// kernel: tpu_custom_call.1
$region0: #{tpu_custom_call.1}
  #allocation0 [shape = 'u32[]', space=smem, size = 0x4, offset = 0x4, fixed_abs, tag = 'smem constant byte address 0x4 - core index']
  #allocation1 [shape = 'u32[144,128]{1,0:T(1,128)}', space=vmem, size = 0x12000, scoped, tag = 'internal scratch']
  %s0 = inlined_call_operand.vmem [shape: f32[2,256], index: 0, kind: input, shape index: {}]
  %s1 = inlined_call_operand.vmem [shape: f32[256,24], index: 1, kind: input, shape index: {}]
  %s2 = inlined_call_operand.vmem [shape: f32[1,24], index: 2, kind: input, shape index: {}]
  %s3 = inlined_call_operand.hbm [shape: f32[2,24], index: 3, kind: output, shape index: {}]
  %s4 = sld [smem:[#allocation0]]
  $region22: #{tpu_custom_call.1} parent=0
    _
  %s6 = ssub.s32 1, %s4
  %s7 = scalar_select 0, %s6, %s4
  $region1: #{tpu_custom_call.1} parent=0
    #allocation2 [shape = 'u8[1024]{0}', space=vmem, size = 0x400, scoped, tag = 'output window, operand 0, single buffered']
    #allocation3 [shape = 's32[1]{0}', space=sflag, size = 0x4, scoped, tag = 'scoped memory for tpu_custom_call.1']
    %8 = vsyncpa [#allocation3], 0
    // Predicated region
    $region2: #{tpu_custom_call.1} parent=1 // pred_check
      _
    $region3: #{tpu_custom_call.1} parent=1 // pred_check_branch
      %10 = sbr.rel (0) target = $region5
    $region4: #{tpu_custom_call.1} parent=1 // pred_region
      _
    $region5: #{tpu_custom_call.1} parent=1 // pred_fallthru
      _
    // Predicated region
    $region6: #{tpu_custom_call.1} parent=1 // pred_check
      _
    $region7: #{tpu_custom_call.1} parent=1 // pred_check_branch
      %12 = sbr.rel (0) target = $region9
    $region8: #{tpu_custom_call.1} parent=1 // pred_region
      _
    $region9: #{tpu_custom_call.1} parent=1 // pred_fallthru
      _
    // Predicated region
    $region10: #{tpu_custom_call.1} parent=1 // pred_check
      _
    $region11: #{tpu_custom_call.1} parent=1 // pred_check_branch
      %14 = sbr.rel (0) target = $region13
    $region12: #{tpu_custom_call.1} parent=1 // pred_region
      _
    $region13: #{tpu_custom_call.1} parent=1 // pred_fallthru
      _
    %v15 = vld [vmem:[%s0] sm:$0xf]
    %v16 = vld [vmem:[%s1] sm:$0xff]
    %v17 = vld [vmem:[%s1 + $0x8] sm:$0xff]
    %v18 = vld [vmem:[%s1 + $0x10] sm:$0xff]
    %v19 = vld [vmem:[%s1 + $0x18] sm:$0xff]
    %v20 = vld [vmem:[%s1 + $0x20] sm:$0xff]
    %v21 = vld [vmem:[%s1 + $0x28] sm:$0xff]
    %v22 = vld [vmem:[%s1 + $0x30] sm:$0xff]
    %v23 = vld [vmem:[%s1 + $0x38] sm:$0xff]
    %v24 = vld [vmem:[%s1 + $0x40] sm:$0xff]
    %v25 = vld [vmem:[%s1 + $0x48] sm:$0xff]
    %v26 = vld [vmem:[%s1 + $0x50] sm:$0xff]
    %v27 = vld [vmem:[%s1 + $0x58] sm:$0xff]
    %v28 = vld [vmem:[%s1 + $0x60] sm:$0xff]
    %v29 = vld [vmem:[%s1 + $0x68] sm:$0xff]
    %v30 = vld [vmem:[%s1 + $0x70] sm:$0xff]
    %v31 = vld [vmem:[%s1 + $0x78] sm:$0xff]
    %v32 = vld [vmem:[%s1 + $0x80] sm:$0xff]
    %v33 = vld [vmem:[%s1 + $0x88] sm:$0xff]
    %v34 = vld [vmem:[%s1 + $0x90] sm:$0xff]
    %v35 = vld [vmem:[%s1 + $0x98] sm:$0xff]
    %v36 = vld [vmem:[%s1 + $0xa0] sm:$0xff]
    %v37 = vld [vmem:[%s1 + $0xa8] sm:$0xff]
    %v38 = vld [vmem:[%s1 + $0xb0] sm:$0xff]
    %v39 = vld [vmem:[%s1 + $0xb8] sm:$0xff]
    %v40 = vld [vmem:[%s1 + $0xc0] sm:$0xff]
    %v41 = vld [vmem:[%s1 + $0xc8] sm:$0xff]
    %v42 = vld [vmem:[%s1 + $0xd0] sm:$0xff]
    %v43 = vld [vmem:[%s1 + $0xd8] sm:$0xff]
    %v44 = vld [vmem:[%s1 + $0xe0] sm:$0xff]
    %v45 = vld [vmem:[%s1 + $0xe8] sm:$0xff]
    %v46 = vld [vmem:[%s1 + $0xf0] sm:$0xff]
    %v47 = vld [vmem:[%s1 + $0xf8] sm:$0xff]
    %v48 = vld [vmem:[%s2] sm:$0x1]
    %v50 = vlaneseq
    %v51 = vshrl.u32 %v50, 7
    %v52 = vsub.s32 0, %v51
    %v53 = vrot.slane %v48, %v52
    %v57 = vunpack.c.l.s4 1983009808
    %v58 = vunpack.c.0.s8 %v57
    %v59 = vlaneseq
    %v60 = vshrl.u32 %v59, 7
    %v61 = vsub.s32 %v58, %v60
    %v62 = vrot.slane %v15, %v61
    %v63 = vcombine.high %v62, %v62
    %66 = vmatprep.subr.mxu0 0.0
    %67 = vmatpush1.msra.mxu0 %v16
    %68 = vmatprep.subr.mxu0 0.0
    %69 = vmatpush1.msra.mxu0 %v17
    %70 = vmatprep.subr.mxu0 0.0
    %71 = vmatpush1.msra.mxu0 %v18
    %72 = vmatprep.subr.mxu0 0.0
    %73 = vmatpush1.msra.mxu0 %v19
    %74 = vmatprep.subr.mxu0 0.0
    %75 = vmatpush1.msra.mxu0 %v20
    %76 = vmatprep.subr.mxu0 0.0
    %77 = vmatpush1.msra.mxu0 %v21
    %78 = vmatprep.subr.mxu0 0.0
    %79 = vmatpush1.msra.mxu0 %v22
    %80 = vmatprep.subr.mxu0 0.0
    %81 = vmatpush1.msra.mxu0 %v23
    %82 = vmatprep.subr.mxu0 0.0
    %83 = vmatpush1.msra.mxu0 %v24
    %84 = vmatprep.subr.mxu0 0.0
    %85 = vmatpush1.msra.mxu0 %v25
    %86 = vmatprep.subr.mxu0 0.0
    %87 = vmatpush1.msra.mxu0 %v26
    %88 = vmatprep.subr.mxu0 0.0
    %89 = vmatpush1.msra.mxu0 %v27
    %90 = vmatprep.subr.mxu0 0.0
    %91 = vmatpush1.msra.mxu0 %v28
    %92 = vmatprep.subr.mxu0 0.0
    %93 = vmatpush1.msra.mxu0 %v29
    %94 = vmatprep.subr.mxu0 0.0
    %95 = vmatpush1.msra.mxu0 %v30
    %96 = vmatprep.subr.mxu0 0.0
    %97 = vmatpush1.msra.mxu0 %v31
    %98 = vmatprep.subr.mxu0 0.0
    %99 = vmatpush1.msra.mxu0 %v32
    %100 = vmatprep.subr.mxu0 0.0
    %101 = vmatpush1.msra.mxu0 %v33
    %102 = vmatprep.subr.mxu0 0.0
    %103 = vmatpush1.msra.mxu0 %v34
    %104 = vmatprep.subr.mxu0 0.0
    %105 = vmatpush1.msra.mxu0 %v35
    %106 = vmatprep.subr.mxu0 0.0
    %107 = vmatpush1.msra.mxu0 %v36
    %108 = vmatprep.subr.mxu0 0.0
    %109 = vmatpush1.msra.mxu0 %v37
    %110 = vmatprep.subr.mxu0 0.0
    %111 = vmatpush1.msra.mxu0 %v38
    %112 = vmatprep.subr.mxu0 0.0
    %113 = vmatpush1.msra.mxu0 %v39
    %114 = vmatprep.subr.mxu0 0.0
    %115 = vmatpush1.msra.mxu0 %v40
    %116 = vmatprep.subr.mxu0 0.0
    %117 = vmatpush1.msra.mxu0 %v41
    %118 = vmatprep.subr.mxu0 0.0
    %119 = vmatpush1.msra.mxu0 %v42
    %120 = vmatprep.subr.mxu0 0.0
    %121 = vmatpush1.msra.mxu0 %v43
    %122 = vmatprep.subr.mxu0 0.0
    %123 = vmatpush1.msra.mxu0 %v44
    %124 = vmatprep.subr.mxu0 0.0
    %125 = vmatpush1.msra.mxu0 %v45
    %126 = vmatprep.subr.mxu0 0.0
    %127 = vmatpush1.msra.mxu0 %v46
    %128 = vmatprep.subr.mxu0 0.0
    %129 = vmatpush1.msra.mxu0 %v47
    %130 = vmatprep.mubr.f32.mxu0 %v63
    %131 = vmatmul.mubr.f32.gmra.mrb[0].mxu0 %v62
    %v132 = vpop.f32.mrb[0].mxu0
    %v133 = vadd.f32 %v53, %v132
    %v134 = vpop.f32.mrb[0].mxu0
    %135 = vdwg.mxu0
    %vm136 = vcmask 189440
    %137 = vst.msk [vmem:[#allocation2] sm:$0x3] %vm136, %v133
    // Predicated region
    $region14: #{tpu_custom_call.1} parent=1 // pred_check
      _
    $region15: #{tpu_custom_call.1} parent=1 // pred_check_branch
      %139 = sbr.rel (0) target = $region17
    $region16: #{tpu_custom_call.1} parent=1 // pred_region
      %s141 = ssub.s32 32, 32
      %142 = vsyncadd [#allocation3], %s141
      %s144 = sshll.u32 [#allocation2], 4
      %s145 = int_to_ptr.vmem [resolvable:$true] %s144
      %147 = dma.vmem_to_hbm [thread:$0]  %s145, 32, %s3, [#allocation3]
    $region17: #{tpu_custom_call.1} parent=1 // pred_fallthru
      _
    // Predicated region
    $region18: #{tpu_custom_call.1} parent=1 // pred_check
      _
    $region19: #{tpu_custom_call.1} parent=1 // pred_check_branch
      %149 = sbr.rel (0) target = $region21
    $region20: #{tpu_custom_call.1} parent=1 // pred_region
      %150 = dma.done [#allocation3], 32
    $region21: #{tpu_custom_call.1} parent=1 // pred_fallthru
      _
    %151 = vsyncpa [#allocation3], 1

</llo_original>
